<compile_context>
chip_gen: v5e
topology: v5e:2x2
jax: 0.10.0
libtpu: 0.0.40
codegen_flags: <defaults>
</compile_context>

<pallas_src>
import jax
import jax.numpy as jnp
from jax.experimental import pallas as pl
from jax.experimental.pallas import tpu as pltpu

BN_EPS = 1e-5
LEAKY_SLOPE = 0.2
MAX_TILE_PIXELS = 8192                 # lane-axis pixel tile (multiple of 128)
VMEM_LIMIT_BYTES = 32 * 1024 * 1024    # fits v7x (64 MiB phys), lifts v5e's 16 MiB default


def _leaky_relu(x):
    return jnp.where(x > 0, x, LEAKY_SLOPE * x)


def _stats_kernel(x_ref, w1t_ref, b1_ref, g_ref, s1_ref):
    """Pass 1: per-tile Gram statistics of y1 = lrelu(conv1(x)).

    Emits G = Y1 Y1^T (64,64) (contraction over the pixel axis -> full MXU K
    fill) and s1 = sum_p y1 (64,1).  zsum / zsq of conv2's output are
    reconstructed from these in XLA, halving pass-1 MXU work vs materializing z.
    """
    x = x_ref[...]                                                    # (Cin, TP) bf16
    y1 = jnp.dot(w1t_ref[...], x,
                 preferred_element_type=jnp.float32) + b1_ref[...]    # (64, TP) f32
    y1 = _leaky_relu(y1)
    y1b = y1.astype(jnp.bfloat16)
    g = jax.lax.dot_general(y1b, y1b, (((1,), (1,)), ((), ())),
                            preferred_element_type=jnp.float32)       # (64, 64) f32
    g_ref[0] = g
    s1_ref[0] = jnp.sum(y1, axis=1, keepdims=True)                    # (64, 1)


def _fwd_kernel(x_ref, w1t_ref, b1_ref, w2t_ref, scale_ref, shift_ref,
                w3_ref, b3_ref, s_ref):
    """Pass 2: recompute y1/z, apply folded BN + LeakyReLU + conv3 + sigmoid.

    Everything is channel-major / lane-dense; the sigmoid row (1, TP) is
    written unmasked to this tile's own output block (fully parallel grid).
    """
    x = x_ref[...]                                                    # (Cin, TP) bf16
    y1 = _leaky_relu(jnp.dot(w1t_ref[...], x,
                             preferred_element_type=jnp.float32) + b1_ref[...])
    z = jnp.dot(w2t_ref[...], y1.astype(jnp.bfloat16),
                preferred_element_type=jnp.float32)                   # (128, TP); b2 folded into shift
    a = _leaky_relu(z * scale_ref[...] + shift_ref[...])              # BN as a single FMA
    # conv3 (128 -> 1): VPU multiply + sublane reduce; logits stay lane-dense.
    logits = jnp.sum(a * w3_ref[...], axis=0, keepdims=True) + b3_ref[...]   # (1, TP)
    s_ref[0] = jax.nn.sigmoid(logits)


def _pick_tile(p, max_tp):
    """Largest multiple-of-128 divisor of P that is <= max_tp (lane-dense tiles)."""
    best = None
    for cand in range(128, min(p, max_tp) + 1, 128):
        if p % cand == 0:
            best = cand
    if best is None:
        # TODO(synk): P not a multiple of 128 falls back to a single full tile;
        # very large odd pixel counts would need lane-axis padding instead.
        return p
    return best


def pixel_discriminator(x_nchw, params, max_tile_pixels=MAX_TILE_PIXELS):
    """x_nchw: (N, Cin, H, W) float32.  Returns (N,) float32."""
    N, Cin, H, W = x_nchw.shape
    HW = H * W
    P = N * HW
    TP = _pick_tile(P, max_tile_pixels)
    num_tiles = P // TP

    # NCHW -> channel-major (Cin, P): cheap leading-axis permute, 128-lane-dense tiles.
    x_cm = jnp.transpose(x_nchw, (1, 0, 2, 3)).reshape(Cin, P).astype(jnp.bfloat16)

    w1, b1, w2, b2, gamma, beta, w3, b3 = params
    w1t = w1.T.astype(jnp.bfloat16)                     # (64, Cin)
    w2t = w2.T.astype(jnp.bfloat16)                     # (128, 64)
    b1c = b1.reshape(64, 1).astype(jnp.float32)
    w3c = w3.reshape(128, 1).astype(jnp.float32)
    b3c = b3.reshape(1, 1).astype(jnp.float32)

    def resident(shape):
        return pl.BlockSpec(shape, lambda i: (0,) * len(shape))

    x_spec = pl.BlockSpec((Cin, TP), lambda i: (0, i))
    cparams = pltpu.CompilerParams(
        dimension_semantics=("parallel",),              # per-tile outputs -> megacore-friendly
        vmem_limit_bytes=VMEM_LIMIT_BYTES)

    # ---- pass 1: per-tile Gram statistics -----------------------------------
    g_tiles, s1_tiles = pl.pallas_call(
        _stats_kernel,
        out_shape=(jax.ShapeDtypeStruct((num_tiles, 64, 64), jnp.float32),
                   jax.ShapeDtypeStruct((num_tiles, 64, 1), jnp.float32)),
        grid_spec=pltpu.PrefetchScalarGridSpec(
            num_scalar_prefetch=0,
            grid=(num_tiles,),
            in_specs=[x_spec, resident(w1t.shape), resident(b1c.shape)],
            out_specs=[pl.BlockSpec((1, 64, 64), lambda i: (i, 0, 0)),
                       pl.BlockSpec((1, 64, 1), lambda i: (i, 0, 0))]),
        compiler_params=cparams,
    )(x_cm, w1t, b1c)

    # ---- XLA glue: reconstruct BatchNorm stats, fold into scale / shift -----
    g = jnp.sum(g_tiles, axis=0)                        # (64, 64)
    s1 = jnp.sum(s1_tiles, axis=0)[:, 0]                # (64,)
    w2f = w2.astype(jnp.bfloat16).astype(jnp.float32)   # match pass-2's bf16 weights
    b2r = b2.reshape(128).astype(jnp.float32)
    u_sum = s1 @ w2f                                    # sum_p (y1 @ W2), (128,)
    zsum = u_sum + P * b2r
    zsq = jnp.sum(w2f * (g @ w2f), axis=0) + 2.0 * b2r * u_sum + P * b2r * b2r
    mean = zsum / P
    # TODO(synk): E[z^2] - E[z]^2 in f32 can cancel badly with trained weights
    # (large per-channel means); switch to a centered / Welford accumulation then.
    var = jnp.maximum(zsq / P - mean * mean, 0.0)
    inv_std = jax.lax.rsqrt(var + BN_EPS)
    scale = gamma.reshape(128) * inv_std
    shift = (b2r - mean) * scale + beta.reshape(128)    # conv2 bias folded into BN shift
    scale_c = scale.reshape(128, 1).astype(jnp.float32)
    shift_c = shift.reshape(128, 1).astype(jnp.float32)

    # ---- pass 2: conv1/conv2 recompute + BN + conv3 + sigmoid ----------------
    s_tiles = pl.pallas_call(
        _fwd_kernel,
        out_shape=jax.ShapeDtypeStruct((num_tiles, 1, TP), jnp.float32),
        grid_spec=pltpu.PrefetchScalarGridSpec(
            num_scalar_prefetch=0,
            grid=(num_tiles,),
            in_specs=[x_spec, resident(w1t.shape), resident(b1c.shape),
                      resident(w2t.shape), resident(scale_c.shape),
                      resident(shift_c.shape), resident(w3c.shape),
                      resident(b3c.shape)],
            out_specs=pl.BlockSpec((1, 1, TP), lambda i: (i, 0, 0))),
        compiler_params=cparams,
    )(x_cm, w1t, b1c, w2t, scale_c, shift_c, w3c, b3c)

    # Per-sample spatial mean: tiles are contiguous pixel chunks in (n, h, w) order.
    return jnp.mean(s_tiles.reshape(N, HW), axis=1)


def init_params(key, in_channel):
    """Synthetic init matching the module: conv weights and BN gamma ~ N(0, 0.02)
    (the spec's norm_layer explicitly re-inits the BN weight with N(0, 0.02)).
    Biases / BN beta get small random values to exercise the bias-folding math."""
    k1, k2, k3, k4, k5, k6, k7, k8 = jax.random.split(key, 8)
    std = 0.02
    w1 = std * jax.random.normal(k1, (in_channel, 64), jnp.float32)   # conv1: (64,Cin,1,1) -> (Cin,64)
    b1 = std * jax.random.normal(k5, (1, 64), jnp.float32)
    w2 = std * jax.random.normal(k2, (64, 128), jnp.float32)          # conv2: (128,64,1,1) -> (64,128)
    b2 = std * jax.random.normal(k6, (1, 128), jnp.float32)
    gamma = std * jax.random.normal(k3, (1, 128), jnp.float32)        # BN weight ~ N(0, 0.02)
    beta = std * jax.random.normal(k7, (1, 128), jnp.float32)
    w3 = std * jax.random.normal(k4, (128, 1), jnp.float32)           # conv3: (1,128,1,1) -> (128,1)
    b3 = std * jax.random.normal(k8, (1, 1), jnp.float32)
    return (w1, b1, w2, b2, gamma, beta, w3, b3)


def _reference(x_nchw, params):
    """Pure-JAX f32 reference (same math as the PyTorch module)."""
    N, Cin, H, W = x_nchw.shape
    x = jnp.transpose(x_nchw, (0, 2, 3, 1)).reshape(N * H * W, Cin).astype(jnp.float32)
    w1, b1, w2, b2, gamma, beta, w3, b3 = params
    y1 = _leaky_relu(x @ w1 + b1)
    z = y1 @ w2 + b2
    mean = jnp.mean(z, axis=0, keepdims=True)
    var = jnp.mean((z - mean) ** 2, axis=0, keepdims=True)
    z2 = _leaky_relu((z - mean) * jax.lax.rsqrt(var + BN_EPS) * gamma + beta)
    s = jax.nn.sigmoid(z2 @ w3 + b3)                    # (P, 1)
    return jnp.mean(s.reshape(N, H * W), axis=1)


if __name__ == "__main__":
    key = jax.random.PRNGKey(0)
    kx, kp = jax.random.split(key)

    # config: non-conditional, out_channel = 4  => in_channel = 4
    N, Cin, H, W = 2, 4, 16, 16
    x = jax.random.normal(kx, (N, Cin, H, W), jnp.float32)
    params = init_params(kp, Cin)

    ref = jax.block_until_ready(_reference(x, params))

    out = jax.block_until_ready(pixel_discriminator(x, params))
    assert out.shape == (N,), out.shape
    # bf16 matmul inputs (f32 accumulation) vs f32 reference -> small tolerance.
    assert jnp.allclose(out, ref, atol=1e-3, rtol=1e-3), (out, ref)

    # Also exercise the multi-tile path (grid > 1, cross-tile G / s1 reduction).
    out_mt = jax.block_until_ready(pixel_discriminator(x, params, max_tile_pixels=128))
    assert jnp.allclose(out_mt, ref, atol=1e-3, rtol=1e-3), (out_mt, ref)

    print("KERNEL_OK")
</pallas_src>

<mosaic_0001>
module attributes {stable_mosaic.version = 11 : i64} {
  func.func @_stats_kernel(%arg0: i32, %arg1: memref<4x512xbf16, #tpu.memory_space<vmem>>, %arg2: memref<64x4xbf16, #tpu.memory_space<vmem>>, %arg3: memref<64x1xf32, #tpu.memory_space<vmem>>, %arg4: memref<1x64x64xf32, #tpu.memory_space<vmem>>, %arg5: memref<1x64x1xf32, #tpu.memory_space<vmem>>) attributes {dimension_semantics = [#tpu.dimension_semantics<parallel>], iteration_bounds = array<i64: 1>, scalar_prefetch = 0 : i64, scratch_operands = 0 : i64, tpu.core_type = #tpu.core_type<tc>, window_params = [{transform_indices = @transform_0, window_bounds = array<i64: 4, 512>}, {pipeline_mode = #tpu.pipeline_mode<synchronous>, transform_indices = @transform_1, window_bounds = array<i64: 64, 4>}, {pipeline_mode = #tpu.pipeline_mode<synchronous>, transform_indices = @transform_2, window_bounds = array<i64: 64, 1>}, {transform_indices = @transform_3, window_bounds = array<i64: 1, 64, 64>}, {transform_indices = @transform_4, window_bounds = array<i64: 1, 64, 1>}]} {
    %c0 = arith.constant 0 : index
    %c0_0 = arith.constant 0 : index
    %0 = vector.load %arg1[%c0, %c0_0] : memref<4x512xbf16, #tpu.memory_space<vmem>>, vector<4x512xbf16>
    %c0_1 = arith.constant 0 : index
    %c0_2 = arith.constant 0 : index
    %1 = vector.load %arg2[%c0_1, %c0_2] : memref<64x4xbf16, #tpu.memory_space<vmem>>, vector<64x4xbf16>
    %cst = arith.constant dense<0.000000e+00> : vector<64x512xf32>
    %2 = tpu.matmul %1, %0, %cst {dimension_numbers = #tpu.dot_dimension_numbers<[1], [0], [0], [1], [0, 0, 1, 1], [], []>} : vector<64x4xbf16>, vector<4x512xbf16>, vector<64x512xf32> -> vector<64x512xf32>
    %c0_3 = arith.constant 0 : index
    %c0_4 = arith.constant 0 : index
    %3 = vector.load %arg3[%c0_3, %c0_4] : memref<64x1xf32, #tpu.memory_space<vmem>>, vector<64x1xf32>
    %4 = vector.broadcast %3 : vector<64x1xf32> to vector<64x512xf32>
    %5 = arith.addf %2, %4 : vector<64x512xf32>
    %cst_5 = arith.constant 0.000000e+00 : f32
    %6 = vector.broadcast %cst_5 : f32 to vector<64x512xf32>
    %7 = arith.cmpf ogt, %5, %6 : vector<64x512xf32>
    %cst_6 = arith.constant 2.000000e-01 : f32
    %8 = vector.broadcast %cst_6 : f32 to vector<64x512xf32>
    %9 = arith.mulf %8, %5 : vector<64x512xf32>
    %10 = arith.select %7, %5, %9 : vector<64x512xi1>, vector<64x512xf32>
    %11 = arith.truncf %10 : vector<64x512xf32> to vector<64x512xbf16>
    %cst_7 = arith.constant dense<0.000000e+00> : vector<64x64xf32>
    %12 = tpu.matmul %11, %11, %cst_7 {dimension_numbers = #tpu.dot_dimension_numbers<[1], [1], [0], [0], [0, 0, 1, 0], [], []>} : vector<64x512xbf16>, vector<64x512xbf16>, vector<64x64xf32> -> vector<64x64xf32>
    %c0_8 = arith.constant 0 : index
    %c0_9 = arith.constant 0 : index
    %c0_10 = arith.constant 0 : index
    %13 = vector.load %arg4[%c0_8, %c0_9, %c0_10] : memref<1x64x64xf32, #tpu.memory_space<vmem>>, vector<1x64x64xf32>
    %14 = vector.shape_cast %13 : vector<1x64x64xf32> to vector<64x64xf32>
    %15 = vector.shape_cast %12 : vector<64x64xf32> to vector<1x64x64xf32>
    tpu.vector_store %arg4[%c0_8, %c0_9, %c0_10], %15 {strides = array<i32>} : memref<1x64x64xf32, #tpu.memory_space<vmem>>, vector<1x64x64xf32>,
    %cst_11 = arith.constant dense<0.000000e+00> : vector<64xf32>
    %16 = vector.multi_reduction <add>, %10, %cst_11 [1] : vector<64x512xf32> to vector<64xf32>
    %17 = vector.shape_cast %16 : vector<64xf32> to vector<64x1xf32>
    %c0_12 = arith.constant 0 : index
    %c0_13 = arith.constant 0 : index
    %c0_14 = arith.constant 0 : index
    %18 = vector.load %arg5[%c0_12, %c0_13, %c0_14] : memref<1x64x1xf32, #tpu.memory_space<vmem>>, vector<1x64x1xf32>
    %19 = vector.shape_cast %18 : vector<1x64x1xf32> to vector<64x1xf32>
    %20 = vector.shape_cast %17 : vector<64x1xf32> to vector<1x64x1xf32>
    tpu.vector_store %arg5[%c0_12, %c0_13, %c0_14], %20 {strides = array<i32>} : memref<1x64x1xf32, #tpu.memory_space<vmem>>, vector<1x64x1xf32>,
    return
  }
  func.func @transform_0(%arg0: i32) -> (i32, i32) {
    %c0_i32 = arith.constant 0 : i32
    %c0_i32_0 = arith.constant 0 : i32
    return %c0_i32, %arg0 : i32, i32
  }
  func.func @transform_1(%arg0: i32) -> (i32, i32) {
    %c0_i32 = arith.constant 0 : i32
    %c0_i32_0 = arith.constant 0 : i32
    %c0_i32_1 = arith.constant 0 : i32
    return %c0_i32, %c0_i32_0 : i32, i32
  }
  func.func @transform_2(%arg0: i32) -> (i32, i32) {
    %c0_i32 = arith.constant 0 : i32
    %c0_i32_0 = arith.constant 0 : i32
    %c0_i32_1 = arith.constant 0 : i32
    return %c0_i32, %c0_i32_0 : i32, i32
  }
  func.func @transform_3(%arg0: i32) -> (i32, i32, i32) {
    %c0_i32 = arith.constant 0 : i32
    %c0_i32_0 = arith.constant 0 : i32
    %c0_i32_1 = arith.constant 0 : i32
    return %arg0, %c0_i32, %c0_i32_0 : i32, i32, i32
  }
  func.func @transform_4(%arg0: i32) -> (i32, i32, i32) {
    %c0_i32 = arith.constant 0 : i32
    %c0_i32_0 = arith.constant 0 : i32
    %c0_i32_1 = arith.constant 0 : i32
    return %arg0, %c0_i32, %c0_i32_0 : i32, i32, i32
  }
}

</mosaic_0001>

<llo_original>
// kernel: tpu_custom_call.1
$region0: #{tpu_custom_call.1}
  #allocation0 [shape = 'u32[]', space=smem, size = 0x4, offset = 0x4, fixed_abs, tag = 'smem constant byte address 0x4 - core index']
  #allocation1 [shape = 'u32[72,128]{1,0:T(1,128)}', space=vmem, size = 0x9000, scoped, tag = 'internal scratch']
  %s0 = inlined_call_operand.vmem [shape: bf16[4,512], index: 0, kind: input, shape index: {}]
  %s1 = inlined_call_operand.vmem [shape: bf16[64,4], index: 1, kind: input, shape index: {}]
  %s2 = inlined_call_operand.vmem [shape: f32[64,1], index: 2, kind: input, shape index: {}]
  %s3 = inlined_call_operand.hbm [shape: f32[1,64,64], index: 3, kind: output, shape index: {0}]
  %s4 = inlined_call_operand.vmem [shape: f32[1,64,1], index: 4, kind: output, shape index: {1}]
  %5 = xla_tuple %s3, %s4
  %s6 = sld [smem:[#allocation0]]
  $region30: #{tpu_custom_call.1} parent=0
    _
  %s8 = ssub.s32 1, %s6
  %s9 = scalar_select 0, %s8, %s6
  $region1: #{tpu_custom_call.1} parent=0
    #allocation2 [shape = 'u8[32768]{0}', space=vmem, size = 0x8000, scoped, tag = 'output window, operand 0, single buffered']
    #allocation3 [shape = 's32[1]{0}', space=sflag, size = 0x4, scoped, tag = 'scoped memory for tpu_custom_call.1']
    %10 = vsyncpa [#allocation3], 0
    // Predicated region
    $region2: #{tpu_custom_call.1} parent=1 // pred_check
      _
    $region3: #{tpu_custom_call.1} parent=1 // pred_check_branch
      %12 = sbr.rel (0) target = $region5
    $region4: #{tpu_custom_call.1} parent=1 // pred_region
      _
    $region5: #{tpu_custom_call.1} parent=1 // pred_fallthru
      _
    // Predicated region
    $region6: #{tpu_custom_call.1} parent=1 // pred_check
      _
    $region7: #{tpu_custom_call.1} parent=1 // pred_check_branch
      %14 = sbr.rel (0) target = $region9
    $region8: #{tpu_custom_call.1} parent=1 // pred_region
      _
    $region9: #{tpu_custom_call.1} parent=1 // pred_fallthru
      _
    // Predicated region
    $region10: #{tpu_custom_call.1} parent=1 // pred_check
      _
    $region11: #{tpu_custom_call.1} parent=1 // pred_check_branch
      %16 = sbr.rel (0) target = $region13
    $region12: #{tpu_custom_call.1} parent=1 // pred_region
      _
    $region13: #{tpu_custom_call.1} parent=1 // pred_fallthru
      _
    %v18 = vld [vmem:[%s0] sm:$0xff]
    %v19 = vld [vmem:[%s1] sm:$0xf]
    %v20 = vld [vmem:[%s1 + $0x4] sm:$0xf]
    %v21 = vld [vmem:[%s1 + $0x8] sm:$0xf]
    %v22 = vld [vmem:[%s1 + $0xc] sm:$0xf]
    %v23 = vld [vmem:[%s1 + $0x10] sm:$0xf]
    %v24 = vld [vmem:[%s1 + $0x14] sm:$0xf]
    %v25 = vld [vmem:[%s1 + $0x18] sm:$0xf]
    %v26 = vld [vmem:[%s1 + $0x1c] sm:$0xf]
    %v27 = vld [vmem:[%s2] sm:$0xff]
    %v28 = vld [vmem:[%s2 + $0x8] sm:$0xff]
    %v29 = vld [vmem:[%s2 + $0x10] sm:$0xff]
    %v30 = vld [vmem:[%s2 + $0x18] sm:$0xff]
    %v31 = vld [vmem:[%s2 + $0x20] sm:$0xff]
    %v32 = vld [vmem:[%s2 + $0x28] sm:$0xff]
    %v33 = vld [vmem:[%s2 + $0x30] sm:$0xff]
    %v34 = vld [vmem:[%s2 + $0x38] sm:$0xff]
    %36 = vset.pattern.permute.xlu0 0
    %37 = vperm.xlu0 %36, %v27
    %v38 = vpop.permute.xlu0 %37
    %41 = vset.pattern.permute.xlu0 0
    %42 = vperm.xlu0 %41, %v28
    %v43 = vpop.permute.xlu0 %42
    %46 = vset.pattern.permute.xlu0 0
    %47 = vperm.xlu0 %46, %v29
    %v48 = vpop.permute.xlu0 %47
    %51 = vset.pattern.permute.xlu0 0
    %52 = vperm.xlu0 %51, %v30
    %v53 = vpop.permute.xlu0 %52
    %56 = vset.pattern.permute.xlu0 0
    %57 = vperm.xlu0 %56, %v31
    %v58 = vpop.permute.xlu0 %57
    %61 = vset.pattern.permute.xlu0 0
    %62 = vperm.xlu0 %61, %v32
    %v63 = vpop.permute.xlu0 %62
    %66 = vset.pattern.permute.xlu0 0
    %67 = vperm.xlu0 %66, %v33
    %v68 = vpop.permute.xlu0 %67
    %71 = vset.pattern.permute.xlu0 0
    %72 = vperm.xlu0 %71, %v34
    %v73 = vpop.permute.xlu0 %72
    %v83 = vunpack.c.l.b16 %v19
    %v84 = vunpack.c.l.b16 %v20
    %v85 = vunpack.c.l.b16 %v21
    %v86 = vunpack.c.l.b16 %v22
    %v87 = vunpack.c.l.b16 %v23
    %v88 = vunpack.c.l.b16 %v24
    %v89 = vunpack.c.l.b16 %v25
    %v90 = vunpack.c.l.b16 %v26
    %v91 = vpack.c.b16 %v84, %v83
    %v92 = vpack.c.b16 %v86, %v85
    %v93 = vpack.c.b16 %v88, %v87
    %v94 = vpack.c.b16 %v90, %v89
    %96 = vst [vmem:[#allocation1] ss:$4 sm:$0xff] %v18
    %v97 = vld.sshfl [vmem:[#allocation1] sm:$0xff pattern:$0x73625140]
    %v98 = vld.sshfl [vmem:[#allocation1 + $0x8] sm:$0xff pattern:$0x73625140]
    %v99 = vld.sshfl [vmem:[#allocation1 + $0x10] sm:$0xff pattern:$0x73625140]
    %v100 = vld.sshfl [vmem:[#allocation1 + $0x18] sm:$0xff pattern:$0x73625140]
    %vm101 = vcmask 31744
    %v103 = vsel %vm101, %v91, 0
    %v106 = vsel %vm101, %v92, 0
    %v109 = vsel %vm101, %v93, 0
    %v112 = vsel %vm101, %v94, 0
    %vm114 = vcmask 1041408
    %v115 = vsel %vm114, %v97, 0
    %v117 = vsel %vm114, %v98, 0
    %v119 = vsel %vm114, %v99, 0
    %v121 = vsel %vm114, %v100, 0
    %123 = vmatpush.bf16.msra.mxu0 0
    %124 = vmatpush.bf16.msra.mxu0 0
    %125 = vmatpush.bf16.msra.mxu0 0
    %126 = vmatpush.bf16.msra.mxu0 0
    %127 = vmatpush.bf16.msra.mxu0 0
    %128 = vmatpush.bf16.msra.mxu0 0
    %129 = vmatpush.bf16.msra.mxu0 0
    %130 = vmatpush.bf16.msra.mxu0 %v115
    %131 = vmatmul.bf16.gmra.mxu0 %v103
    %v132 = vpop.f32.mrf.mxu0
    %v133 = vadd.f32 %v38, %v132
    %v134 = vpop.f32.mrf.mxu0
    %v135 = vadd.f32 %v43, %v134
    %136 = vmatmul.bf16.gmra.mxu0 %v106
    %v137 = vpop.f32.mrf.mxu0
    %v138 = vadd.f32 %v48, %v137
    %v139 = vpop.f32.mrf.mxu0
    %v140 = vadd.f32 %v53, %v139
    %141 = vmatmul.bf16.gmra.mxu0 %v109
    %v142 = vpop.f32.mrf.mxu0
    %v143 = vadd.f32 %v58, %v142
    %v144 = vpop.f32.mrf.mxu0
    %v145 = vadd.f32 %v63, %v144
    %146 = vmatmul.bf16.gmra.mxu0 %v112
    %v147 = vpop.f32.mrf.mxu0
    %v148 = vadd.f32 %v68, %v147
    %v149 = vpop.f32.mrf.mxu0
    %v150 = vadd.f32 %v73, %v149
    %151 = vdwg.mxu0
    %152 = vmatpush.bf16.msra.mxu0 0
    %153 = vmatpush.bf16.msra.mxu0 0
    %154 = vmatpush.bf16.msra.mxu0 0
    %155 = vmatpush.bf16.msra.mxu0 0
    %156 = vmatpush.bf16.msra.mxu0 0
    %157 = vmatpush.bf16.msra.mxu0 0
    %158 = vmatpush.bf16.msra.mxu0 0
    %159 = vmatpush.bf16.msra.mxu0 %v117
    %160 = vmatmul.bf16.gmra.mxu0 %v103
    %v161 = vpop.f32.mrf.mxu0
    %v162 = vadd.f32 %v38, %v161
    %v163 = vpop.f32.mrf.mxu0
    %v164 = vadd.f32 %v43, %v163
    %165 = vmatmul.bf16.gmra.mxu0 %v106
    %v166 = vpop.f32.mrf.mxu0
    %v167 = vadd.f32 %v48, %v166
    %v168 = vpop.f32.mrf.mxu0
    %v169 = vadd.f32 %v53, %v168
    %170 = vmatmul.bf16.gmra.mxu0 %v109
    %v171 = vpop.f32.mrf.mxu0
    %v172 = vadd.f32 %v58, %v171
    %v173 = vpop.f32.mrf.mxu0
    %v174 = vadd.f32 %v63, %v173
    %175 = vmatmul.bf16.gmra.mxu0 %v112
    %v176 = vpop.f32.mrf.mxu0
    %v177 = vadd.f32 %v68, %v176
    %v178 = vpop.f32.mrf.mxu0
    %v179 = vadd.f32 %v73, %v178
    %180 = vdwg.mxu0
    %181 = vmatpush.bf16.msra.mxu0 0
    %182 = vmatpush.bf16.msra.mxu0 0
    %183 = vmatpush.bf16.msra.mxu0 0
    %184 = vmatpush.bf16.msra.mxu0 0
    %185 = vmatpush.bf16.msra.mxu0 0
    %186 = vmatpush.bf16.msra.mxu0 0
    %187 = vmatpush.bf16.msra.mxu0 0
    %188 = vmatpush.bf16.msra.mxu0 %v119
    %189 = vmatmul.bf16.gmra.mxu0 %v103
    %v190 = vpop.f32.mrf.mxu0
    %v191 = vadd.f32 %v38, %v190
    %v192 = vpop.f32.mrf.mxu0
    %v193 = vadd.f32 %v43, %v192
    %194 = vmatmul.bf16.gmra.mxu0 %v106
    %v195 = vpop.f32.mrf.mxu0
    %v196 = vadd.f32 %v48, %v195
    %v197 = vpop.f32.mrf.mxu0
    %v198 = vadd.f32 %v53, %v197
    %199 = vmatmul.bf16.gmra.mxu0 %v109
    %v200 = vpop.f32.mrf.mxu0
    %v201 = vadd.f32 %v58, %v200
    %v202 = vpop.f32.mrf.mxu0
    %v203 = vadd.f32 %v63, %v202
    %204 = vmatmul.bf16.gmra.mxu0 %v112
    %v205 = vpop.f32.mrf.mxu0
    %v206 = vadd.f32 %v68, %v205
    %v207 = vpop.f32.mrf.mxu0
    %v208 = vadd.f32 %v73, %v207
    %209 = vdwg.mxu0
    %210 = vmatpush.bf16.msra.mxu0 0
    %211 = vmatpush.bf16.msra.mxu0 0
    %212 = vmatpush.bf16.msra.mxu0 0
    %213 = vmatpush.bf16.msra.mxu0 0
    %214 = vmatpush.bf16.msra.mxu0 0
    %215 = vmatpush.bf16.msra.mxu0 0
    %216 = vmatpush.bf16.msra.mxu0 0
    %217 = vmatpush.bf16.msra.mxu0 %v121
    %218 = vmatmul.bf16.gmra.mxu0 %v103
    %v219 = vpop.f32.mrf.mxu0
    %v220 = vadd.f32 %v38, %v219
    %v221 = vpop.f32.mrf.mxu0
    %v222 = vadd.f32 %v43, %v221
    %223 = vmatmul.bf16.gmra.mxu0 %v106
    %v224 = vpop.f32.mrf.mxu0
    %v225 = vadd.f32 %v48, %v224
    %v226 = vpop.f32.mrf.mxu0
    %v227 = vadd.f32 %v53, %v226
    %228 = vmatmul.bf16.gmra.mxu0 %v109
    %v229 = vpop.f32.mrf.mxu0
    %v230 = vadd.f32 %v58, %v229
    %v231 = vpop.f32.mrf.mxu0
    %v232 = vadd.f32 %v63, %v231
    %233 = vmatmul.bf16.gmra.mxu0 %v112
    %v234 = vpop.f32.mrf.mxu0
    %v235 = vadd.f32 %v68, %v234
    %v236 = vpop.f32.mrf.mxu0
    %v237 = vadd.f32 %v73, %v236
    %238 = vdwg.mxu0
    %vm239 = vcmp.gt.f32.partialorder %v133, 0.0
    %vm240 = vcmp.gt.f32.partialorder %v162, 0.0
    %vm241 = vcmp.gt.f32.partialorder %v191, 0.0
    %vm242 = vcmp.gt.f32.partialorder %v220, 0.0
    %vm243 = vcmp.gt.f32.partialorder %v135, 0.0
    %vm244 = vcmp.gt.f32.partialorder %v164, 0.0
    %vm245 = vcmp.gt.f32.partialorder %v193, 0.0
    %vm246 = vcmp.gt.f32.partialorder %v222, 0.0
    %vm247 = vcmp.gt.f32.partialorder %v138, 0.0
    %vm248 = vcmp.gt.f32.partialorder %v167, 0.0
    %vm249 = vcmp.gt.f32.partialorder %v196, 0.0
    %vm250 = vcmp.gt.f32.partialorder %v225, 0.0
    %vm251 = vcmp.gt.f32.partialorder %v140, 0.0
    %vm252 = vcmp.gt.f32.partialorder %v169, 0.0
    %vm253 = vcmp.gt.f32.partialorder %v198, 0.0
    %vm254 = vcmp.gt.f32.partialorder %v227, 0.0
    %vm255 = vcmp.gt.f32.partialorder %v143, 0.0
    %vm256 = vcmp.gt.f32.partialorder %v172, 0.0
    %vm257 = vcmp.gt.f32.partialorder %v201, 0.0
    %vm258 = vcmp.gt.f32.partialorder %v230, 0.0
    %vm259 = vcmp.gt.f32.partialorder %v145, 0.0
    %vm260 = vcmp.gt.f32.partialorder %v174, 0.0
    %vm261 = vcmp.gt.f32.partialorder %v203, 0.0
    %vm262 = vcmp.gt.f32.partialorder %v232, 0.0
    %vm263 = vcmp.gt.f32.partialorder %v148, 0.0
    %vm264 = vcmp.gt.f32.partialorder %v177, 0.0
    %vm265 = vcmp.gt.f32.partialorder %v206, 0.0
    %vm266 = vcmp.gt.f32.partialorder %v235, 0.0
    %vm267 = vcmp.gt.f32.partialorder %v150, 0.0
    %vm268 = vcmp.gt.f32.partialorder %v179, 0.0
    %vm269 = vcmp.gt.f32.partialorder %v208, 0.0
    %vm270 = vcmp.gt.f32.partialorder %v237, 0.0
    %v271 = vmul.f32 %v133, 0.2
    %v272 = vmul.f32 %v162, 0.2
    %v273 = vmul.f32 %v191, 0.2
    %v274 = vmul.f32 %v220, 0.2
    %v275 = vmul.f32 %v135, 0.2
    %v276 = vmul.f32 %v164, 0.2
    %v277 = vmul.f32 %v193, 0.2
    %v278 = vmul.f32 %v222, 0.2
    %v279 = vmul.f32 %v138, 0.2
    %v280 = vmul.f32 %v167, 0.2
    %v281 = vmul.f32 %v196, 0.2
    %v282 = vmul.f32 %v225, 0.2
    %v283 = vmul.f32 %v140, 0.2
    %v284 = vmul.f32 %v169, 0.2
    %v285 = vmul.f32 %v198, 0.2
    %v286 = vmul.f32 %v227, 0.2
    %v287 = vmul.f32 %v143, 0.2
    %v288 = vmul.f32 %v172, 0.2
    %v289 = vmul.f32 %v201, 0.2
    %v290 = vmul.f32 %v230, 0.2
    %v291 = vmul.f32 %v145, 0.2
    %v292 = vmul.f32 %v174, 0.2
    %v293 = vmul.f32 %v203, 0.2
    %v294 = vmul.f32 %v232, 0.2
    %v295 = vmul.f32 %v148, 0.2
    %v296 = vmul.f32 %v177, 0.2
    %v297 = vmul.f32 %v206, 0.2
    %v298 = vmul.f32 %v235, 0.2
    %v299 = vmul.f32 %v150, 0.2
    %v300 = vmul.f32 %v179, 0.2
    %v301 = vmul.f32 %v208, 0.2
    %v302 = vmul.f32 %v237, 0.2
    %v303 = vsel %vm239, %v133, %v271
    %v304 = vsel %vm240, %v162, %v272
    %v305 = vsel %vm241, %v191, %v273
    %v306 = vsel %vm242, %v220, %v274
    %v307 = vsel %vm243, %v135, %v275
    %v308 = vsel %vm244, %v164, %v276
    %v309 = vsel %vm245, %v193, %v277
    %v310 = vsel %vm246, %v222, %v278
    %v311 = vsel %vm247, %v138, %v279
    %v312 = vsel %vm248, %v167, %v280
    %v313 = vsel %vm249, %v196, %v281
    %v314 = vsel %vm250, %v225, %v282
    %v315 = vsel %vm251, %v140, %v283
    %v316 = vsel %vm252, %v169, %v284
    %v317 = vsel %vm253, %v198, %v285
    %v318 = vsel %vm254, %v227, %v286
    %v319 = vsel %vm255, %v143, %v287
    %v320 = vsel %vm256, %v172, %v288
    %v321 = vsel %vm257, %v201, %v289
    %v322 = vsel %vm258, %v230, %v290
    %v323 = vsel %vm259, %v145, %v291
    %v324 = vsel %vm260, %v174, %v292
    %v325 = vsel %vm261, %v203, %v293
    %v326 = vsel %vm262, %v232, %v294
    %v327 = vsel %vm263, %v148, %v295
    %v328 = vsel %vm264, %v177, %v296
    %v329 = vsel %vm265, %v206, %v297
    %v330 = vsel %vm266, %v235, %v298
    %v331 = vsel %vm267, %v150, %v299
    %v332 = vsel %vm268, %v179, %v300
    %v333 = vsel %vm269, %v208, %v301
    %v334 = vsel %vm270, %v237, %v302
    %v335 = vpack.c.bf16 %v307, %v303
    %v336 = vpack.c.bf16 %v308, %v304
    %v337 = vpack.c.bf16 %v309, %v305
    %v338 = vpack.c.bf16 %v310, %v306
    %v339 = vpack.c.bf16 %v315, %v311
    %v340 = vpack.c.bf16 %v316, %v312
    %v341 = vpack.c.bf16 %v317, %v313
    %v342 = vpack.c.bf16 %v318, %v314
    %v343 = vpack.c.bf16 %v323, %v319
    %v344 = vpack.c.bf16 %v324, %v320
    %v345 = vpack.c.bf16 %v325, %v321
    %v346 = vpack.c.bf16 %v326, %v322
    %v347 = vpack.c.bf16 %v331, %v327
    %v348 = vpack.c.bf16 %v332, %v328
    %v349 = vpack.c.bf16 %v333, %v329
    %v350 = vpack.c.bf16 %v334, %v330
    %351 = vmatpush.bf16.xpose.msra.mxu0 0
    %352 = vmatpush.bf16.xpose.msra.mxu0 0
    %353 = vmatpush.bf16.xpose.msra.mxu0 0
    %354 = vmatpush.bf16.xpose.msra.mxu0 0
    %355 = vmatpush.bf16.xpose.msra.mxu0 %v347
    %356 = vmatpush.bf16.xpose.msra.mxu0 %v343
    %357 = vmatpush.bf16.xpose.msra.mxu0 %v339
    %358 = vmatpush.bf16.xpose.msra.mxu0 %v335
    %359 = vmatmul.bf16.gmra.mxu0 %v335
    %v360 = vpop.f32.mrf.mxu0
    %v361 = vadd.f32 0.0, %v360
    %v362 = vpop.f32.mrf.mxu0
    %v363 = vadd.f32 0.0, %v362
    %364 = vmatmul.bf16.gmra.mxu0 %v339
    %v365 = vpop.f32.mrf.mxu0
    %v366 = vadd.f32 0.0, %v365
    %v367 = vpop.f32.mrf.mxu0
    %v368 = vadd.f32 0.0, %v367
    %369 = vmatmul.bf16.gmra.mxu0 %v343
    %v370 = vpop.f32.mrf.mxu0
    %v371 = vadd.f32 0.0, %v370
    %v372 = vpop.f32.mrf.mxu0
    %v373 = vadd.f32 0.0, %v372
    %374 = vmatmul.bf16.gmra.mxu0 %v347
    %v375 = vpop.f32.mrf.mxu0
    %v376 = vadd.f32 0.0, %v375
    %v377 = vpop.f32.mrf.mxu0
    %v378 = vadd.f32 0.0, %v377
    %379 = vdwg.mxu0
    %380 = vmatpush.bf16.xpose.msra.mxu0 0
    %381 = vmatpush.bf16.xpose.msra.mxu0 0
    %382 = vmatpush.bf16.xpose.msra.mxu0 0
    %383 = vmatpush.bf16.xpose.msra.mxu0 0
    %384 = vmatpush.bf16.xpose.msra.mxu0 %v348
    %385 = vmatpush.bf16.xpose.msra.mxu0 %v344
    %386 = vmatpush.bf16.xpose.msra.mxu0 %v340
    %387 = vmatpush.bf16.xpose.msra.mxu0 %v336
    %388 = vmatmul.bf16.gmra.mxu0 %v336
    %v389 = vpop.f32.mrf.mxu0
    %v390 = vadd.f32 %v361, %v389
    %v391 = vpop.f32.mrf.mxu0
    %v392 = vadd.f32 %v363, %v391
    %393 = vmatmul.bf16.gmra.mxu0 %v340
    %v394 = vpop.f32.mrf.mxu0
    %v395 = vadd.f32 %v366, %v394
    %v396 = vpop.f32.mrf.mxu0
    %v397 = vadd.f32 %v368, %v396
    %398 = vmatmul.bf16.gmra.mxu0 %v344
    %v399 = vpop.f32.mrf.mxu0
    %v400 = vadd.f32 %v371, %v399
    %v401 = vpop.f32.mrf.mxu0
    %v402 = vadd.f32 %v373, %v401
    %403 = vmatmul.bf16.gmra.mxu0 %v348
    %v404 = vpop.f32.mrf.mxu0
    %v405 = vadd.f32 %v376, %v404
    %v406 = vpop.f32.mrf.mxu0
    %v407 = vadd.f32 %v378, %v406
    %408 = vdwg.mxu0
    %409 = vmatpush.bf16.xpose.msra.mxu0 0
    %410 = vmatpush.bf16.xpose.msra.mxu0 0
    %411 = vmatpush.bf16.xpose.msra.mxu0 0
    %412 = vmatpush.bf16.xpose.msra.mxu0 0
    %413 = vmatpush.bf16.xpose.msra.mxu0 %v349
    %414 = vmatpush.bf16.xpose.msra.mxu0 %v345
    %415 = vmatpush.bf16.xpose.msra.mxu0 %v341
    %416 = vmatpush.bf16.xpose.msra.mxu0 %v337
    %417 = vmatmul.bf16.gmra.mxu0 %v337
    %v418 = vpop.f32.mrf.mxu0
    %v419 = vadd.f32 %v390, %v418
    %v420 = vpop.f32.mrf.mxu0
    %v421 = vadd.f32 %v392, %v420
    %422 = vmatmul.bf16.gmra.mxu0 %v341
    %v423 = vpop.f32.mrf.mxu0
    %v424 = vadd.f32 %v395, %v423
    %v425 = vpop.f32.mrf.mxu0
    %v426 = vadd.f32 %v397, %v425
    %427 = vmatmul.bf16.gmra.mxu0 %v345
    %v428 = vpop.f32.mrf.mxu0
    %v429 = vadd.f32 %v400, %v428
    %v430 = vpop.f32.mrf.mxu0
    %v431 = vadd.f32 %v402, %v430
    %432 = vmatmul.bf16.gmra.mxu0 %v349
    %v433 = vpop.f32.mrf.mxu0
    %v434 = vadd.f32 %v405, %v433
    %v435 = vpop.f32.mrf.mxu0
    %v436 = vadd.f32 %v407, %v435
    %437 = vdwg.mxu0
    %438 = vmatpush.bf16.xpose.msra.mxu0 0
    %439 = vmatpush.bf16.xpose.msra.mxu0 0
    %440 = vmatpush.bf16.xpose.msra.mxu0 0
    %441 = vmatpush.bf16.xpose.msra.mxu0 0
    %442 = vmatpush.bf16.xpose.msra.mxu0 %v350
    %443 = vmatpush.bf16.xpose.msra.mxu0 %v346
    %444 = vmatpush.bf16.xpose.msra.mxu0 %v342
    %445 = vmatpush.bf16.xpose.msra.mxu0 %v338
    %446 = vmatmul.bf16.gmra.mxu0 %v338
    %v447 = vpop.f32.mrf.mxu0
    %v448 = vadd.f32 %v419, %v447
    %v449 = vpop.f32.mrf.mxu0
    %v450 = vadd.f32 %v421, %v449
    %451 = vmatmul.bf16.gmra.mxu0 %v342
    %v452 = vpop.f32.mrf.mxu0
    %v453 = vadd.f32 %v424, %v452
    %v454 = vpop.f32.mrf.mxu0
    %v455 = vadd.f32 %v426, %v454
    %456 = vmatmul.bf16.gmra.mxu0 %v346
    %v457 = vpop.f32.mrf.mxu0
    %v458 = vadd.f32 %v429, %v457
    %v459 = vpop.f32.mrf.mxu0
    %v460 = vadd.f32 %v431, %v459
    %461 = vmatmul.bf16.gmra.mxu0 %v350
    %v462 = vpop.f32.mrf.mxu0
    %v463 = vadd.f32 %v434, %v462
    %v464 = vpop.f32.mrf.mxu0
    %v465 = vadd.f32 %v436, %v464
    %466 = vdwg.mxu0
    %vm467 = vcmask 523264
    %468 = vst.msk [vmem:[#allocation2] sm:$0xff] %vm467, %v448
    %469 = vst.msk [vmem:[#allocation2 + $0x8] sm:$0xff] %vm467, %v450
    %470 = vst.msk [vmem:[#allocation2 + $0x10] sm:$0xff] %vm467, %v453
    %471 = vst.msk [vmem:[#allocation2 + $0x18] sm:$0xff] %vm467, %v455
    %472 = vst.msk [vmem:[#allocation2 + $0x20] sm:$0xff] %vm467, %v458
    %473 = vst.msk [vmem:[#allocation2 + $0x28] sm:$0xff] %vm467, %v460
    %474 = vst.msk [vmem:[#allocation2 + $0x30] sm:$0xff] %vm467, %v463
    %475 = vst.msk [vmem:[#allocation2 + $0x38] sm:$0xff] %vm467, %v465
    %v476 = vadd.f32 %v303, %v304
    %v477 = vadd.f32 %v476, %v305
    %v478 = vadd.f32 %v477, %v306
    %479 = vadd.xlane.f32.xlu0 %v478
    %v480 = vpop.xlane.xlu0 %479
    %v481 = vadd.f32 %v307, %v308
    %v482 = vadd.f32 %v481, %v309
    %v483 = vadd.f32 %v482, %v310
    %484 = vadd.xlane.f32.xlu0 %v483
    %v485 = vpop.xlane.xlu0 %484
    %v486 = vadd.f32 %v311, %v312
    %v487 = vadd.f32 %v486, %v313
    %v488 = vadd.f32 %v487, %v314
    %489 = vadd.xlane.f32.xlu0 %v488
    %v490 = vpop.xlane.xlu0 %489
    %v491 = vadd.f32 %v315, %v316
    %v492 = vadd.f32 %v491, %v317
    %v493 = vadd.f32 %v492, %v318
    %494 = vadd.xlane.f32.xlu0 %v493
    %v495 = vpop.xlane.xlu0 %494
    %v496 = vadd.f32 %v319, %v320
    %v497 = vadd.f32 %v496, %v321
    %v498 = vadd.f32 %v497, %v322
    %499 = vadd.xlane.f32.xlu0 %v498
    %v500 = vpop.xlane.xlu0 %499
    %v501 = vadd.f32 %v323, %v324
    %v502 = vadd.f32 %v501, %v325
    %v503 = vadd.f32 %v502, %v326
    %504 = vadd.xlane.f32.xlu0 %v503
    %v505 = vpop.xlane.xlu0 %504
    %v506 = vadd.f32 %v327, %v328
    %v507 = vadd.f32 %v506, %v329
    %v508 = vadd.f32 %v507, %v330
    %509 = vadd.xlane.f32.xlu0 %v508
    %v510 = vpop.xlane.xlu0 %509
    %v511 = vadd.f32 %v331, %v332
    %v512 = vadd.f32 %v511, %v333
    %v513 = vadd.f32 %v512, %v334
    %514 = vadd.xlane.f32.xlu0 %v513
    %v515 = vpop.xlane.xlu0 %514
    %vm516 = vcmask 7168
    %517 = vst.msk [vmem:[%s4] sm:$0xff] %vm516, %v480
    %518 = vst.msk [vmem:[%s4 + $0x8] sm:$0xff] %vm516, %v485
    %519 = vst.msk [vmem:[%s4 + $0x10] sm:$0xff] %vm516, %v490
    %520 = vst.msk [vmem:[%s4 + $0x18] sm:$0xff] %vm516, %v495
    %521 = vst.msk [vmem:[%s4 + $0x20] sm:$0xff] %vm516, %v500
    %522 = vst.msk [vmem:[%s4 + $0x28] sm:$0xff] %vm516, %v505
    %523 = vst.msk [vmem:[%s4 + $0x30] sm:$0xff] %vm516, %v510
    %524 = vst.msk [vmem:[%s4 + $0x38] sm:$0xff] %vm516, %v515
    // Predicated region
    $region14: #{tpu_custom_call.1} parent=1 // pred_check
      _
    $region15: #{tpu_custom_call.1} parent=1 // pred_check_branch
      %526 = sbr.rel (0) target = $region17
    $region16: #{tpu_custom_call.1} parent=1 // pred_region
      %528 = vsyncadd [#allocation3], 0
      %s529 = sshll.u32 [#allocation2], 4
      %s530 = int_to_ptr.vmem [resolvable:$true] %s529
      %s531 = sshll.u32 %s3, 4
      %s532 = int_to_ptr.hbm [resolvable:$true] %s531
      %537 = dma.vmem_to_hbm [thread:$0]  %s530, 1024, %s532, [#allocation3], 128, 128, 8
    $region17: #{tpu_custom_call.1} parent=1 // pred_fallthru
      _
    // Predicated region
    $region18: #{tpu_custom_call.1} parent=1 // pred_check
      _
    $region19: #{tpu_custom_call.1} parent=1 // pred_check_branch
      %539 = sbr.rel (0) target = $region21
    $region20: #{tpu_custom_call.1} parent=1 // pred_region
      _
    $region21: #{tpu_custom_call.1} parent=1 // pred_fallthru
      _
    // Predicated region
    $region22: #{tpu_custom_call.1} parent=1 // pred_check
      _
    $region23: #{tpu_custom_call.1} parent=1 // pred_check_branch
      %541 = sbr.rel (0) target = $region25
    $region24: #{tpu_custom_call.1} parent=1 // pred_region
      %543 = dma.done [#allocation3], 1024
    $region25: #{tpu_custom_call.1} parent=1 // pred_fallthru
      _
    // Predicated region
    $region26: #{tpu_custom_call.1} parent=1 // pred_check
      _
    $region27: #{tpu_custom_call.1} parent=1 // pred_check_branch
      %545 = sbr.rel (0) target = $region29
    $region28: #{tpu_custom_call.1} parent=1 // pred_region
      _
    $region29: #{tpu_custom_call.1} parent=1 // pred_fallthru
      _
    %546 = vsyncpa [#allocation3], 1

</llo_original>
